<compile_context>
chip_gen: v5e
topology: v5e:2x2
jax: 0.10.0
libtpu: 0.0.40
codegen_flags: <defaults>
</compile_context>

<pallas_src>
import functools

import jax
import jax.numpy as jnp
from jax.experimental import pallas as pl
from jax.experimental.pallas import tpu as pltpu


# ---------------------------------------------------------------------------
# Kernels
# ---------------------------------------------------------------------------

def _se_fused_kernel(x_ref, w1_ref, w2_ref, o_ref, *, inv_hw):
    """Single-pass SE block for one (Bt, C, HW) batch group."""
    x = x_ref[...]                                              # (Bt, C, HW)

    # Squeeze: global average pool, accumulated in f32 (bf16-safe); the
    # upcast is fused into the reduction (no materialized f32 block copy).
    pooled = jnp.sum(x, axis=-1, dtype=jnp.float32) * inv_hw    # (Bt, C)

    # Excitation: Linear -> ReLU -> Linear -> Sigmoid (transpose-free).
    h = jnp.dot(pooled, w1_ref[...].astype(jnp.float32),
                preferred_element_type=jnp.float32)             # (Bt, C_red)
    h = jnp.maximum(h, 0.0)
    s = jnp.dot(h, w2_ref[...].astype(jnp.float32),
                preferred_element_type=jnp.float32)             # (Bt, C)
    s = jax.nn.sigmoid(s)

    # Scale: broadcast the per-(sample, channel) gate over the lane axis.
    o_ref[...] = x * s.astype(x.dtype)[:, :, None]              # (Bt, C, HW)


def _pool_excite_kernel(x_ref, w1_ref, w2_ref, gate_ref, acc_ref, *,
                        inv_hw, hw_tile, hw_total, mask_tail):
    """HW-tiled squeeze + excitation; emits the (1, C, 1) sigmoid gate."""
    hw_idx = pl.program_id(1)

    @pl.when(hw_idx == 0)
    def _():
        acc_ref[...] = jnp.zeros_like(acc_ref)

    x = x_ref[...]                                              # (1, C, hw_tile)
    if mask_tail:
        # Zero out lanes past the real HW on the ragged last tile.
        lane = jax.lax.broadcasted_iota(jnp.int32, x.shape, dimension=2)
        x = jnp.where(hw_idx * hw_tile + lane < hw_total, x,
                      jnp.zeros_like(x))
    acc_ref[...] += jnp.sum(x, axis=-1, dtype=jnp.float32)      # (1, C)

    @pl.when(hw_idx == pl.num_programs(1) - 1)
    def _():
        pooled = acc_ref[...] * inv_hw                          # (1, C)
        h = jnp.dot(pooled, w1_ref[...].astype(jnp.float32),
                    preferred_element_type=jnp.float32)
        h = jnp.maximum(h, 0.0)
        s = jnp.dot(h, w2_ref[...].astype(jnp.float32),
                    preferred_element_type=jnp.float32)
        gate_ref[...] = jax.nn.sigmoid(s)[:, :, None]           # (1, C, 1)


def _scale_kernel(gate_ref, x_ref, o_ref):
    """HW-tiled scale: out = x * gate (gate broadcast over the lane axis)."""
    x = x_ref[...]                                              # (1, C, hw_tile)
    o_ref[...] = x * gate_ref[...].astype(x.dtype)              # (1, C, 1) bcast


# ---------------------------------------------------------------------------
# Wrapper / tiling policy
# ---------------------------------------------------------------------------

_TINY_TOTAL_BYTES = 2 * 1024 * 1024


def _vmem_budgets():
    """(max_block_bytes, vmem_limit_bytes), generation-aware."""
    cap = None
    try:
        cap = getattr(pltpu.get_tpu_info(), "vmem_capacity_bytes", None)
    except Exception:
        cap = None
    if cap is None:
        cap = 64 * 1024 * 1024              # conservative: assume v7x-sized VMEM
    if cap >= 96 * 1024 * 1024:             # 128 MiB parts: v5e / v6e
        return 20 * 1024 * 1024, 100 * 1024 * 1024
    return 8 * 1024 * 1024, 48 * 1024 * 1024  # 64 MiB parts: v7x


def _pick_batch_tile(B, per_sample_bytes, max_block_bytes):
    """Batch-group size Bt for the fused path; None => use the HW-tiled path."""
    if per_sample_bytes > max_block_bytes:
        return None
    cap = max(1, max_block_bytes // per_sample_bytes)
    if B * per_sample_bytes <= _TINY_TOTAL_BYTES:
        # Tiny total: single grid step; per-step overhead dominates and the
        # megacore split buys nothing.
        return min(B, cap)
    # Prefer >= 4 grid steps (>= 2 per v7x TensorCore), then >= 2.
    for min_steps in (4, 2):
        bt = (B - 1) // (min_steps - 1)
        if bt >= 1:
            return min(bt, cap)
    return min(B, cap)


def se_block(x, w1, w2, *, max_block_bytes=None, vmem_limit_bytes=None):
    """SE_Block forward.

    x:  (B, C, H, W)
    w1: (C, C_red)  -- first nn.Linear weight, stored as (in, out) = W1.T
    w2: (C_red, C)  -- second nn.Linear weight, stored as (in, out) = W2.T
    """
    B, C, H, W = x.shape
    HW = H * W
    itemsize = jnp.dtype(x.dtype).itemsize
    inv_hw = 1.0 / HW

    default_block, default_limit = _vmem_budgets()
    if max_block_bytes is None:
        max_block_bytes = default_block
    if vmem_limit_bytes is None:
        vmem_limit_bytes = default_limit

    x_flat = x.reshape(B, C, HW)            # no padding: full-extent HW block

    per_sample_bytes = C * HW * itemsize
    bt = _pick_batch_tile(B, per_sample_bytes, max_block_bytes)

    if bt is not None:
        # ---- Fused single-pass path ---------------------------------------
        grid = (pl.cdiv(B, bt),)
        out_flat = pl.pallas_call(
            functools.partial(_se_fused_kernel, inv_hw=inv_hw),
            out_shape=jax.ShapeDtypeStruct((B, C, HW), x.dtype),
            grid_spec=pltpu.PrefetchScalarGridSpec(
                num_scalar_prefetch=0,
                grid=grid,
                in_specs=[
                    pl.BlockSpec((bt, C, HW), lambda b: (b, 0, 0)),
                    # Constant block index -> fetched once, VMEM-resident.
                    pl.BlockSpec(w1.shape, lambda b: (0, 0)),
                    pl.BlockSpec(w2.shape, lambda b: (0, 0)),
                ],
                out_specs=pl.BlockSpec((bt, C, HW), lambda b: (b, 0, 0)),
            ),
            compiler_params=pltpu.CompilerParams(
                dimension_semantics=("parallel",),
                vmem_limit_bytes=vmem_limit_bytes,
            ),
        )(x_flat, w1, w2)
        return out_flat.reshape(B, C, H, W)

    # ---- HW-tiled fallback path (a single sample exceeds the block budget) -
    hw_tile = max(128, (max_block_bytes // (C * itemsize)) // 128 * 128)
    n_hw = pl.cdiv(HW, hw_tile)
    mask_tail = (HW % hw_tile) != 0

    gate = pl.pallas_call(
        functools.partial(_pool_excite_kernel, inv_hw=inv_hw, hw_tile=hw_tile,
                          hw_total=HW, mask_tail=mask_tail),
        out_shape=jax.ShapeDtypeStruct((B, C, 1), jnp.float32),
        grid_spec=pltpu.PrefetchScalarGridSpec(
            num_scalar_prefetch=0,
            grid=(B, n_hw),
            in_specs=[
                pl.BlockSpec((1, C, hw_tile), lambda b, h: (b, 0, h)),
                pl.BlockSpec(w1.shape, lambda b, h: (0, 0)),
                pl.BlockSpec(w2.shape, lambda b, h: (0, 0)),
            ],
            out_specs=pl.BlockSpec((1, C, 1), lambda b, h: (b, 0, 0)),
            scratch_shapes=[pltpu.VMEM((1, C), jnp.float32)],
        ),
        compiler_params=pltpu.CompilerParams(
            dimension_semantics=("parallel", "arbitrary"),
            vmem_limit_bytes=vmem_limit_bytes,
        ),
    )(x_flat, w1, w2)

    out_flat = pl.pallas_call(
        _scale_kernel,
        out_shape=jax.ShapeDtypeStruct((B, C, HW), x.dtype),
        grid_spec=pltpu.PrefetchScalarGridSpec(
            num_scalar_prefetch=0,
            grid=(B, n_hw),
            in_specs=[
                pl.BlockSpec((1, C, 1), lambda b, h: (b, 0, 0)),
                pl.BlockSpec((1, C, hw_tile), lambda b, h: (b, 0, h)),
            ],
            out_specs=pl.BlockSpec((1, C, hw_tile), lambda b, h: (b, 0, h)),
        ),
        compiler_params=pltpu.CompilerParams(
            dimension_semantics=("parallel", "parallel"),
            vmem_limit_bytes=vmem_limit_bytes,
        ),
    )(gate, x_flat)
    return out_flat.reshape(B, C, H, W)


def se_block_ref(x, w1, w2):
    """Pure-JAX reference mirroring the PyTorch module."""
    y = jnp.mean(x, axis=(2, 3))                 # (B, C)
    y = jnp.maximum(y @ w1, 0.0)                 # (B, C_red)
    y = jax.nn.sigmoid(y @ w2)                   # (B, C)
    return x * y[:, :, None, None]


if __name__ == "__main__":
    # Shapes consistent with SE_Block(ch_in=32, reduction=16).
    B, C, reduction = 2, 32, 16
    C_red = C // reduction

    key = jax.random.PRNGKey(0)
    kx, k1, k2, kx2 = jax.random.split(key, 4)

    # Deterministic synthetic weights, stored as (in, out) = W.T of nn.Linear.
    w1 = jax.random.normal(k1, (C, C_red), dtype=jnp.float32) * 0.1
    w2 = jax.random.normal(k2, (C_red, C), dtype=jnp.float32) * 0.1

    # 1) Main fused path, lane-aligned HW.
    x = jax.random.normal(kx, (B, C, 16, 16), dtype=jnp.float32)
    out = jax.block_until_ready(se_block(x, w1, w2))
    ref = se_block_ref(x, w1, w2)
    assert out.shape == x.shape
    assert jnp.allclose(out, ref, atol=1e-5, rtol=1e-5), (
        float(jnp.max(jnp.abs(out - ref))))

    # 2) Fused path with non-128-aligned HW (masked tail store, no pad/slice).
    x_odd = jax.random.normal(kx2, (B, C, 9, 9), dtype=jnp.float32)
    out_odd = jax.block_until_ready(se_block(x_odd, w1, w2))
    ref_odd = se_block_ref(x_odd, w1, w2)
    assert jnp.allclose(out_odd, ref_odd, atol=1e-5, rtol=1e-5), (
        float(jnp.max(jnp.abs(out_odd - ref_odd))))

    # 3) HW-tiled fallback path, forced via a tiny block budget (ragged tail).
    x_big = jax.random.normal(kx, (B, C, 20, 20), dtype=jnp.float32)
    out_big = jax.block_until_ready(
        se_block(x_big, w1, w2, max_block_bytes=16 * 1024))
    ref_big = se_block_ref(x_big, w1, w2)
    assert jnp.allclose(out_big, ref_big, atol=1e-5, rtol=1e-5), (
        float(jnp.max(jnp.abs(out_big - ref_big))))

    print("KERNEL_OK")
</pallas_src>

<mosaic_0001>
module attributes {stable_mosaic.version = 11 : i64} {
  func.func @_se_fused_kernel(%arg0: i32, %arg1: memref<2x32x256xf32, #tpu.memory_space<vmem>>, %arg2: memref<32x2xf32, #tpu.memory_space<vmem>>, %arg3: memref<2x32xf32, #tpu.memory_space<vmem>>, %arg4: memref<2x32x256xf32, #tpu.memory_space<vmem>>) attributes {dimension_semantics = [#tpu.dimension_semantics<parallel>], iteration_bounds = array<i64: 1>, scalar_prefetch = 0 : i64, scratch_operands = 0 : i64, tpu.core_type = #tpu.core_type<tc>, window_params = [{transform_indices = @transform_0, window_bounds = array<i64: 2, 32, 256>}, {pipeline_mode = #tpu.pipeline_mode<synchronous>, transform_indices = @transform_1, window_bounds = array<i64: 32, 2>}, {pipeline_mode = #tpu.pipeline_mode<synchronous>, transform_indices = @transform_2, window_bounds = array<i64: 2, 32>}, {transform_indices = @transform_3, window_bounds = array<i64: 2, 32, 256>}]} {
    %c0 = arith.constant 0 : index
    %c0_0 = arith.constant 0 : index
    %c0_1 = arith.constant 0 : index
    %0 = vector.load %arg1[%c0, %c0_0, %c0_1] : memref<2x32x256xf32, #tpu.memory_space<vmem>>, vector<2x32x256xf32>
    %cst = arith.constant dense<0.000000e+00> : vector<2x32xf32>
    %1 = vector.multi_reduction <add>, %0, %cst [2] : vector<2x32x256xf32> to vector<2x32xf32>
    %cst_2 = arith.constant 3.906250e-03 : f32
    %2 = vector.broadcast %cst_2 : f32 to vector<2x32xf32>
    %3 = arith.mulf %1, %2 : vector<2x32xf32>
    %c0_3 = arith.constant 0 : index
    %c0_4 = arith.constant 0 : index
    %4 = vector.load %arg2[%c0_3, %c0_4] : memref<32x2xf32, #tpu.memory_space<vmem>>, vector<32x2xf32>
    %cst_5 = arith.constant dense<0.000000e+00> : vector<2x2xf32>
    %5 = tpu.matmul %3, %4, %cst_5 {dimension_numbers = #tpu.dot_dimension_numbers<[1], [0], [0], [1], [0, 0, 1, 1], [], []>} : vector<2x32xf32>, vector<32x2xf32>, vector<2x2xf32> -> vector<2x2xf32>
    %cst_6 = arith.constant 0.000000e+00 : f32
    %6 = vector.broadcast %cst_6 : f32 to vector<2x2xf32>
    %7 = arith.maximumf %5, %6 : vector<2x2xf32>
    %c0_7 = arith.constant 0 : index
    %c0_8 = arith.constant 0 : index
    %8 = vector.load %arg3[%c0_7, %c0_8] : memref<2x32xf32, #tpu.memory_space<vmem>>, vector<2x32xf32>
    %cst_9 = arith.constant dense<0.000000e+00> : vector<2x32xf32>
    %9 = tpu.matmul %7, %8, %cst_9 {dimension_numbers = #tpu.dot_dimension_numbers<[1], [0], [0], [1], [0, 0, 1, 1], [], []>} : vector<2x2xf32>, vector<2x32xf32>, vector<2x32xf32> -> vector<2x32xf32>
    %10 = arith.negf %9 : vector<2x32xf32>
    %11 = math.exp %10 : vector<2x32xf32>
    %cst_10 = arith.constant 1.000000e+00 : f32
    %12 = vector.broadcast %cst_10 : f32 to vector<2x32xf32>
    %13 = arith.addf %12, %11 : vector<2x32xf32>
    %14 = arith.divf %12, %13 : vector<2x32xf32>
    %15 = vector.shape_cast %14 : vector<2x32xf32> to vector<2x32x1xf32>
    %16 = vector.broadcast %15 : vector<2x32x1xf32> to vector<2x32x256xf32>
    %17 = arith.mulf %0, %16 : vector<2x32x256xf32>
    %c0_11 = arith.constant 0 : index
    %c0_12 = arith.constant 0 : index
    %c0_13 = arith.constant 0 : index
    %18 = vector.load %arg4[%c0_11, %c0_12, %c0_13] : memref<2x32x256xf32, #tpu.memory_space<vmem>>, vector<2x32x256xf32>
    tpu.vector_store %arg4[%c0_11, %c0_12, %c0_13], %17 {strides = array<i32>} : memref<2x32x256xf32, #tpu.memory_space<vmem>>, vector<2x32x256xf32>,
    return
  }
  func.func @transform_0(%arg0: i32) -> (i32, i32, i32) {
    %c0_i32 = arith.constant 0 : i32
    %c0_i32_0 = arith.constant 0 : i32
    %c0_i32_1 = arith.constant 0 : i32
    return %arg0, %c0_i32, %c0_i32_0 : i32, i32, i32
  }
  func.func @transform_1(%arg0: i32) -> (i32, i32) {
    %c0_i32 = arith.constant 0 : i32
    %c0_i32_0 = arith.constant 0 : i32
    %c0_i32_1 = arith.constant 0 : i32
    return %c0_i32, %c0_i32_0 : i32, i32
  }
  func.func @transform_2(%arg0: i32) -> (i32, i32) {
    %c0_i32 = arith.constant 0 : i32
    %c0_i32_0 = arith.constant 0 : i32
    %c0_i32_1 = arith.constant 0 : i32
    return %c0_i32, %c0_i32_0 : i32, i32
  }
  func.func @transform_3(%arg0: i32) -> (i32, i32, i32) {
    %c0_i32 = arith.constant 0 : i32
    %c0_i32_0 = arith.constant 0 : i32
    %c0_i32_1 = arith.constant 0 : i32
    return %arg0, %c0_i32, %c0_i32_0 : i32, i32, i32
  }
}

</mosaic_0001>

<llo_original>
// kernel: tpu_custom_call.1
$region0: #{tpu_custom_call.1}
  #allocation0 [shape = 'u32[]', space=smem, size = 0x4, offset = 0x4, fixed_abs, tag = 'smem constant byte address 0x4 - core index']
  #allocation1 [shape = 'u32[72,128]{1,0:T(1,128)}', space=vmem, size = 0x9000, scoped, tag = 'internal scratch']
  %s0 = inlined_call_operand.hbm [shape: f32[2,32,256], index: 0, kind: input, shape index: {}]
  %s1 = inlined_call_operand.vmem [shape: f32[32,2], index: 1, kind: input, shape index: {}]
  %s2 = inlined_call_operand.vmem [shape: f32[2,32], index: 2, kind: input, shape index: {}]
  %s3 = inlined_call_operand.hbm [shape: f32[2,32,256], index: 3, kind: output, shape index: {}]
  %s4 = sld [smem:[#allocation0]]
  $region26: #{tpu_custom_call.1} parent=0
    _
  %s6 = ssub.s32 1, %s4
  %s7 = scalar_select 0, %s6, %s4
  $region1: #{tpu_custom_call.1} parent=0
    #allocation2 [shape = 'u8[65536]{0}', space=vmem, size = 0x10000, scoped, tag = 'input window, operand 0, single buffered']
    #allocation3 [shape = 's32[1]{0}', space=sflag, size = 0x4, scoped, tag = 'scoped memory for tpu_custom_call.1']
    #allocation4 [shape = 's32[1]{0}', space=sflag, size = 0x4, scoped, tag = 'scoped memory for tpu_custom_call.1']
    #allocation5 [shape = 'u8[65536]{0}', space=vmem, size = 0x10000, scoped, tag = 'output window, operand 0, single buffered']
    %8 = vsyncpa [#allocation3], 0
    %9 = vsyncpa [#allocation4], 0
    // Predicated region
    $region2: #{tpu_custom_call.1} parent=1 // pred_check
      _
    $region3: #{tpu_custom_call.1} parent=1 // pred_check_branch
      %11 = sbr.rel (0) target = $region5
    $region4: #{tpu_custom_call.1} parent=1 // pred_region
      %13 = vsyncadd [#allocation3], 0
      %s14 = sshll.u32 %s0, 4
      %s15 = int_to_ptr.hbm [resolvable:$true] %s14
      %s16 = sshll.u32 [#allocation2], 4
      %s17 = int_to_ptr.vmem [resolvable:$true] %s16
      %22 = dma.hbm_to_vmem [thread:$0]  %s15, 2048, %s17, [#allocation3], 256, 256, 16
    $region5: #{tpu_custom_call.1} parent=1 // pred_fallthru
      _
    // Predicated region
    $region6: #{tpu_custom_call.1} parent=1 // pred_check
      _
    $region7: #{tpu_custom_call.1} parent=1 // pred_check_branch
      %24 = sbr.rel (0) target = $region9
    $region8: #{tpu_custom_call.1} parent=1 // pred_region
      _
    $region9: #{tpu_custom_call.1} parent=1 // pred_fallthru
      _
    // Predicated region
    $region10: #{tpu_custom_call.1} parent=1 // pred_check
      _
    $region11: #{tpu_custom_call.1} parent=1 // pred_check_branch
      %26 = sbr.rel (0) target = $region13
    $region12: #{tpu_custom_call.1} parent=1 // pred_region
      _
    $region13: #{tpu_custom_call.1} parent=1 // pred_fallthru
      _
    // Predicated region
    $region14: #{tpu_custom_call.1} parent=1 // pred_check
      _
    $region15: #{tpu_custom_call.1} parent=1 // pred_check_branch
      %28 = sbr.rel (0) target = $region17
    $region16: #{tpu_custom_call.1} parent=1 // pred_region
      %30 = dma.done [#allocation3], 2048
    $region17: #{tpu_custom_call.1} parent=1 // pred_fallthru
      _
    %v31 = vld [vmem:[#allocation2] sm:$0xff]
    %v32 = vld [vmem:[#allocation2 + $0x8] sm:$0xff]
    %v33 = vld [vmem:[#allocation2 + $0x10] sm:$0xff]
    %v34 = vld [vmem:[#allocation2 + $0x18] sm:$0xff]
    %v35 = vld [vmem:[#allocation2 + $0x20] sm:$0xff]
    %v36 = vld [vmem:[#allocation2 + $0x28] sm:$0xff]
    %v37 = vld [vmem:[#allocation2 + $0x30] sm:$0xff]
    %v38 = vld [vmem:[#allocation2 + $0x38] sm:$0xff]
    %v39 = vld [vmem:[#allocation2 + $0x40] sm:$0xff]
    %v40 = vld [vmem:[#allocation2 + $0x48] sm:$0xff]
    %v41 = vld [vmem:[#allocation2 + $0x50] sm:$0xff]
    %v42 = vld [vmem:[#allocation2 + $0x58] sm:$0xff]
    %v43 = vld [vmem:[#allocation2 + $0x60] sm:$0xff]
    %v44 = vld [vmem:[#allocation2 + $0x68] sm:$0xff]
    %v45 = vld [vmem:[#allocation2 + $0x70] sm:$0xff]
    %v46 = vld [vmem:[#allocation2 + $0x78] sm:$0xff]
    %v47 = vadd.f32 %v31, %v32
    %48 = vadd.xlane.f32.xlu0 %v47
    %v49 = vpop.xlane.xlu0 %48
    %v50 = vadd.f32 %v33, %v34
    %51 = vadd.xlane.f32.xlu0 %v50
    %v52 = vpop.xlane.xlu0 %51
    %v53 = vadd.f32 %v35, %v36
    %54 = vadd.xlane.f32.xlu0 %v53
    %v55 = vpop.xlane.xlu0 %54
    %v56 = vadd.f32 %v37, %v38
    %57 = vadd.xlane.f32.xlu0 %v56
    %v58 = vpop.xlane.xlu0 %57
    %v59 = vadd.f32 %v39, %v40
    %60 = vadd.xlane.f32.xlu0 %v59
    %v61 = vpop.xlane.xlu0 %60
    %v62 = vadd.f32 %v41, %v42
    %63 = vadd.xlane.f32.xlu0 %v62
    %v64 = vpop.xlane.xlu0 %63
    %v65 = vadd.f32 %v43, %v44
    %66 = vadd.xlane.f32.xlu0 %v65
    %v67 = vpop.xlane.xlu0 %66
    %v68 = vadd.f32 %v45, %v46
    %69 = vadd.xlane.f32.xlu0 %v68
    %v70 = vpop.xlane.xlu0 %69
    %v71 = vmul.f32 %v49, 0.00390625
    %v72 = vmul.f32 %v52, 0.00390625
    %v73 = vmul.f32 %v55, 0.00390625
    %v74 = vmul.f32 %v58, 0.00390625
    %v75 = vmul.f32 %v61, 0.00390625
    %v76 = vmul.f32 %v64, 0.00390625
    %v77 = vmul.f32 %v67, 0.00390625
    %v78 = vmul.f32 %v70, 0.00390625
    %v79 = vld [vmem:[%s1] sm:$0xff]
    %v80 = vld [vmem:[%s1 + $0x8] sm:$0xff]
    %v81 = vld [vmem:[%s1 + $0x10] sm:$0xff]
    %v82 = vld [vmem:[%s1 + $0x18] sm:$0xff]
    %v91 = vlaneseq
    %v92 = vand.u32 %v91, 127
    %v93 = vperm.slane %v71, %v92
    %v94 = vadd.s32 %v92, 4294967288
    %v95 = vperm.slane %v72, %v94
    %vm96 = vcmask 130112
    %v97 = vsel %vm96, %v95, %v93
    %v98 = vadd.s32 %v92, 4294967280
    %v99 = vperm.slane %v73, %v98
    %vm100 = vcmask 195712
    %v101 = vsel %vm100, %v99, %v97
    %v102 = vadd.s32 %v92, 4294967272
    %v103 = vperm.slane %v74, %v102
    %vm104 = vcmask 261312
    %v105 = vsel %vm104, %v103, %v101
    %v106 = vperm.slane %v75, %v92
    %v107 = vperm.slane %v76, %v94
    %v108 = vsel %vm96, %v107, %v106
    %v109 = vperm.slane %v77, %v98
    %v110 = vsel %vm100, %v109, %v108
    %v111 = vperm.slane %v78, %v102
    %v112 = vsel %vm104, %v111, %v110
    %vm113 = vcmask 1041409
    %v114 = vsel %vm113, %v112, %v105
    %vm115 = vcmask 261120
    %v116 = vsel %vm115, %v114, 0
    %118 = vmatpush.msra.mxu0 0.0
    %119 = vmatpush.msra.mxu0 0.0
    %120 = vmatpush.msra.mxu0 0.0
    %121 = vmatpush.msra.mxu0 0.0
    %122 = vmatpush.msra.mxu0 0.0
    %123 = vmatpush.msra.mxu0 0.0
    %124 = vmatpush.msra.mxu0 0.0
    %125 = vmatpush.msra.mxu0 0.0
    %126 = vmatpush.msra.mxu0 0.0
    %127 = vmatpush.msra.mxu0 0.0
    %128 = vmatpush.msra.mxu0 0.0
    %129 = vmatpush.msra.mxu0 0.0
    %130 = vmatpush.msra.mxu0 %v82
    %131 = vmatpush.msra.mxu0 %v81
    %132 = vmatpush.msra.mxu0 %v80
    %133 = vmatpush.msra.mxu0 %v79
    %134 = vmatmul.f32.gmra.mxu0 %v116
    %v135 = vpop.f32.mrf.mxu0
    %v136 = vadd.f32 0.0, %v135
    %137 = vdwg.mxu0
    %v138 = vmax.f32 %v136, 0.0
    %v139 = vld [vmem:[%s2] sm:$0x3]
    %vm140 = vcmask 15360
    %v142 = vsel %vm140, %v138, 0
    %vm144 = vcmask 1041408
    %v146 = vsel %vm144, %v139, 0
    %148 = vmatpush.msra.mxu0 0.0
    %149 = vmatpush.msra.mxu0 0.0
    %150 = vmatpush.msra.mxu0 0.0
    %151 = vmatpush.msra.mxu0 0.0
    %152 = vmatpush.msra.mxu0 0.0
    %153 = vmatpush.msra.mxu0 0.0
    %154 = vmatpush.msra.mxu0 0.0
    %155 = vmatpush.msra.mxu0 0.0
    %156 = vmatpush.msra.mxu0 0.0
    %157 = vmatpush.msra.mxu0 0.0
    %158 = vmatpush.msra.mxu0 0.0
    %159 = vmatpush.msra.mxu0 0.0
    %160 = vmatpush.msra.mxu0 0.0
    %161 = vmatpush.msra.mxu0 0.0
    %162 = vmatpush.msra.mxu0 0.0
    %163 = vmatpush.msra.mxu0 %v146
    %164 = vmatmul.f32.gmra.mxu0 %v142
    %v165 = vpop.f32.mrf.mxu0
    %v166 = vadd.f32 0.0, %v165
    %167 = vdwg.mxu0
    %v168 = vxor.u32 %v166, 2147483648
    %v169 = vmul.f32 %v168, 1.442695
    %v170 = vpow.pop %v169
    %v171 = vadd.f32 %v170, 1.0
    %v172 = vrcp.pop %v171
    %v173 = vmul.f32 %v171, %v172
    %v174 = vsub.f32 1.0, %v173
    %v175 = vmul.f32 %v172, %v174
    %v176 = vadd.f32 %v172, %v175
    %vm177 = vweird.f32 %v171
    %vm178 = vweird.f32 %v172
    %vm179 = vmor %vm177, %vm178
    %v180 = vsel %vm179, %v172, %v176
    %v181 = vand.u32 2147483647, %v171
    %vm182 = vcmp.eq.f32.partialorder %v181, 8.507059e+37
    %v183 = vand.u32 %v171, 2147483648
    %v184 = vor.u32 1.1754944e-38, %v183
    %v185 = vsel %vm182, %v184, %v180
    %v186 = vmul.f32 1.0, %v185
    %v187 = vperm.slane %v186, 0
    %v188 = vlaneseq
    %v189 = vshrl.u32 %v188, 7
    %191 = vset.pattern.permute.xlu0 %v189
    %192 = vperm.xlu0 %191, %v187
    %v193 = vpop.permute.xlu0 %192
    %v194 = vlaneseq
    %v195 = vshrl.u32 %v194, 7
    %v196 = vadd.s32 %v195, 8
    %197 = vset.pattern.permute.xlu0 %v196
    %198 = vperm.xlu0 %197, %v187
    %v199 = vpop.permute.xlu0 %198
    %v200 = vlaneseq
    %v201 = vshrl.u32 %v200, 7
    %v202 = vadd.s32 %v201, 16
    %203 = vset.pattern.permute.xlu0 %v202
    %204 = vperm.xlu0 %203, %v187
    %v205 = vpop.permute.xlu0 %204
    %v206 = vlaneseq
    %v207 = vshrl.u32 %v206, 7
    %v208 = vadd.s32 %v207, 24
    %209 = vset.pattern.permute.xlu0 %v208
    %210 = vperm.xlu0 %209, %v187
    %v211 = vpop.permute.xlu0 %210
    %v212 = vperm.slane %v186, 1
    %v213 = vlaneseq
    %v214 = vshrl.u32 %v213, 7
    %216 = vset.pattern.permute.xlu0 %v214
    %217 = vperm.xlu0 %216, %v212
    %v218 = vpop.permute.xlu0 %217
    %v219 = vlaneseq
    %v220 = vshrl.u32 %v219, 7
    %v221 = vadd.s32 %v220, 8
    %222 = vset.pattern.permute.xlu0 %v221
    %223 = vperm.xlu0 %222, %v212
    %v224 = vpop.permute.xlu0 %223
    %v225 = vlaneseq
    %v226 = vshrl.u32 %v225, 7
    %v227 = vadd.s32 %v226, 16
    %228 = vset.pattern.permute.xlu0 %v227
    %229 = vperm.xlu0 %228, %v212
    %v230 = vpop.permute.xlu0 %229
    %v231 = vlaneseq
    %v232 = vshrl.u32 %v231, 7
    %v233 = vadd.s32 %v232, 24
    %234 = vset.pattern.permute.xlu0 %v233
    %235 = vperm.xlu0 %234, %v212
    %v236 = vpop.permute.xlu0 %235
    %v237 = vmul.f32 %v31, %v193
    %v238 = vmul.f32 %v32, %v193
    %v239 = vmul.f32 %v33, %v199
    %v240 = vmul.f32 %v34, %v199
    %v241 = vmul.f32 %v35, %v205
    %v242 = vmul.f32 %v36, %v205
    %v243 = vmul.f32 %v37, %v211
    %v244 = vmul.f32 %v38, %v211
    %v245 = vmul.f32 %v39, %v218
    %v246 = vmul.f32 %v40, %v218
    %v247 = vmul.f32 %v41, %v224
    %v248 = vmul.f32 %v42, %v224
    %v249 = vmul.f32 %v43, %v230
    %v250 = vmul.f32 %v44, %v230
    %v251 = vmul.f32 %v45, %v236
    %v252 = vmul.f32 %v46, %v236
    %253 = vst [vmem:[#allocation5] sm:$0xff] %v237
    %254 = vst [vmem:[#allocation5 + $0x8] sm:$0xff] %v238
    %255 = vst [vmem:[#allocation5 + $0x10] sm:$0xff] %v239
    %256 = vst [vmem:[#allocation5 + $0x18] sm:$0xff] %v240
    %257 = vst [vmem:[#allocation5 + $0x20] sm:$0xff] %v241
    %258 = vst [vmem:[#allocation5 + $0x28] sm:$0xff] %v242
    %259 = vst [vmem:[#allocation5 + $0x30] sm:$0xff] %v243
    %260 = vst [vmem:[#allocation5 + $0x38] sm:$0xff] %v244
    %261 = vst [vmem:[#allocation5 + $0x40] sm:$0xff] %v245
    %262 = vst [vmem:[#allocation5 + $0x48] sm:$0xff] %v246
    %263 = vst [vmem:[#allocation5 + $0x50] sm:$0xff] %v247
    %264 = vst [vmem:[#allocation5 + $0x58] sm:$0xff] %v248
    %265 = vst [vmem:[#allocation5 + $0x60] sm:$0xff] %v249
    %266 = vst [vmem:[#allocation5 + $0x68] sm:$0xff] %v250
    %267 = vst [vmem:[#allocation5 + $0x70] sm:$0xff] %v251
    %268 = vst [vmem:[#allocation5 + $0x78] sm:$0xff] %v252
    // Predicated region
    $region18: #{tpu_custom_call.1} parent=1 // pred_check
      _
    $region19: #{tpu_custom_call.1} parent=1 // pred_check_branch
      %270 = sbr.rel (0) target = $region21
    $region20: #{tpu_custom_call.1} parent=1 // pred_region
      %272 = vsyncadd [#allocation4], 0
      %s273 = sshll.u32 [#allocation5], 4
      %s274 = int_to_ptr.vmem [resolvable:$true] %s273
      %s275 = sshll.u32 %s3, 4
      %s276 = int_to_ptr.hbm [resolvable:$true] %s275
      %281 = dma.vmem_to_hbm [thread:$0]  %s274, 2048, %s276, [#allocation4], 256, 256, 16
    $region21: #{tpu_custom_call.1} parent=1 // pred_fallthru
      _
    // Predicated region
    $region22: #{tpu_custom_call.1} parent=1 // pred_check
      _
    $region23: #{tpu_custom_call.1} parent=1 // pred_check_branch
      %283 = sbr.rel (0) target = $region25
    $region24: #{tpu_custom_call.1} parent=1 // pred_region
      %285 = dma.done [#allocation4], 2048
    $region25: #{tpu_custom_call.1} parent=1 // pred_fallthru
      _
    %286 = vsyncpa [#allocation3], 1
    %287 = vsyncpa [#allocation4], 1

</llo_original>
